<compile_context>
chip_gen: v6e
topology: v6e:2x2x1
jax: 0.10.0
libtpu: 0.0.40
codegen_flags: <defaults>
</compile_context>

<pallas_src>
import functools

import jax
import jax.numpy as jnp
from jax import lax
from jax.experimental import pallas as pl
from jax.experimental.pallas import tpu as pltpu

_MIB = 1 << 20
_LANE = 128


def _round_up(x, m):
    return (x + m - 1) // m * m


@functools.lru_cache(maxsize=1)
def _vmem_budget_and_limit():
    """Generation-aware working-set budget and scoped-VMEM cap."""
    phys = 64 * _MIB                      # conservative fallback (v7x-sized)
    try:
        info = pltpu.get_tpu_info()
        cap = int(getattr(info, "vmem_capacity_bytes", 0) or 0)
        if cap > 0:
            phys = cap
    except Exception:                      # non-TPU backend / API variation
        pass
    phys = min(max(phys, 32 * _MIB), 128 * _MIB)
    budget = (2 * phys) // 3               # path / tile selection target
    limit = max(32 * _MIB, min((3 * phys) // 4, phys - 12 * _MIB))
    return int(budget), int(limit)


def _mono_vmem_bytes(tb, c, n_blk, chunk, itemsize, mm_itemsize):
    io = 4 * tb * c * n_blk * itemsize                    # double-buffered in + out
    acc = tb * c * (c + 1) * 4 + tb * c * c * mm_itemsize  # scratch + matmul-dtype matrix
    tmp = tb * c * chunk * (16 + 2 * mm_itemsize)           # fp32 chunk temps + operand casts
    return io + acc + tmp


def _tiled_vmem_bytes(c, tn, itemsize, mm_itemsize):
    io = 4 * c * tn * itemsize                              # double-buffered x tile + out tile
    tmp = c * tn * (16 + 2 * mm_itemsize)                   # fp32 temps + operand casts
    mat = c * c * (4 + 3 * mm_itemsize) + 8 * c             # accumulator / matrix blocks
    return io + tmp + mat


# ---------------------------------------------------------------------------
# Small batched-matmul helpers (2-D MXU dots when the batch is 1).
# ---------------------------------------------------------------------------
def _contract_nt(a, b):
    """(tb, C, n) x (tb, M, n) -> (tb, C, M), contracting the last dim, f32 acc."""
    if a.shape[0] == 1:
        r = lax.dot_general(a[0], b[0], (((1,), (1,)), ((), ())),
                            preferred_element_type=jnp.float32)
        return r[None]
    return jnp.einsum('bcn,bmn->bcm', a, b, preferred_element_type=jnp.float32)


def _contract_mn(a, b):
    """(tb, C, M) x (tb, M, n) -> (tb, C, n), f32 acc."""
    if a.shape[0] == 1:
        r = jnp.dot(a[0], b[0], preferred_element_type=jnp.float32)
        return r[None]
    return jnp.einsum('bcm,bmn->bcn', a, b, preferred_element_type=jnp.float32)


# ---------------------------------------------------------------------------
# Monolithic path: one (tb, C, n_blk) slab per grid step, N walked in chunks.
# ---------------------------------------------------------------------------
def _mono_kernel(gamma_ref, x_ref, o_ref, mat_ref, tail_ref, *,
                 eps, n_valid, chunk, matmul_dtype):
    tb, _, n_blk = x_ref.shape
    num_full = n_blk // chunk
    tail_cols = n_blk - num_full * chunk
    ragged = n_valid < n_blk

    # Scratch persists across grid steps -> zero at the start of every step.
    mat_ref[...] = jnp.zeros_like(mat_ref)
    tail_ref[...] = jnp.zeros_like(tail_ref)

    def stats_chunk(off, size):
        xc = x_ref[:, :, pl.ds(off, size)]
        if xc.dtype != jnp.float32:
            xc = xc.astype(jnp.float32)
        if ragged:
            col = off + lax.broadcasted_iota(jnp.int32, (1, 1, size), 2)
            valid = col < n_valid
            xc = jnp.where(valid, xc, 0.0)                    # NaN-safe select
        inv = lax.rsqrt(jnp.sum(xc * xc, axis=1, keepdims=True))   # (tb, 1, size)
        q = xc * inv
        if ragged:
            q = jnp.where(valid, q, 0.0)
        s = jnp.sum(q, axis=1, keepdims=True) + eps               # (tb, 1, size)
        tail_ref[...] = tail_ref[...] + jnp.sum(q * s, axis=2, keepdims=True)
        mat_ref[...] = mat_ref[...] + _contract_nt(
            xc.astype(matmul_dtype), q.astype(matmul_dtype))

    def apply_chunk(off, size, matrix, tailor, gamma):
        xc = x_ref[:, :, pl.ds(off, size)]
        if xc.dtype != jnp.float32:
            xc = xc.astype(jnp.float32)
        inv = lax.rsqrt(jnp.sum(xc * xc, axis=1, keepdims=True))
        q = xc * inv
        vs = jnp.sum(xc, axis=1, keepdims=True)                   # (tb, 1, size)
        mm = _contract_mn(matrix, q.astype(matmul_dtype))         # (tb, C, size)
        o_ref[:, :, pl.ds(off, size)] = (
            xc + gamma * (tailor * (vs + mm))).astype(o_ref.dtype)

    def for_chunks(body):
        if num_full == 1:
            body(0, chunk)
        elif num_full > 1:
            @pl.loop(0, num_full)
            def _(i):
                body(pl.multiple_of(i * chunk, _LANE), chunk)
        if tail_cols > 0:
            body(num_full * chunk, tail_cols)

    # Pass A: accumulate matrix (tb, C, C) and the tailor denominator.
    for_chunks(stats_chunk)

    tailor = 1.0 / (n_valid + tail_ref[...])                      # (tb, C, 1)
    matrix = mat_ref[...].astype(matmul_dtype)                    # (tb, C, C), cast once
    gamma = gamma_ref[0]

    # Pass B: o = x + gamma * tailor * (value_sum + matrix @ q), chunk by chunk.
    for_chunks(lambda off, size: apply_chunk(off, size, matrix, tailor, gamma))


def _choose_mono_config(B, C, N, itemsize, mm_itemsize, budget, mono_chunk):
    n_blk = _round_up(N, _LANE)
    if mono_chunk is not None:                  # testing / tuning override
        chunk = max(_LANE, min(_round_up(int(mono_chunk), _LANE), n_blk))
        if _mono_vmem_bytes(1, C, n_blk, chunk, itemsize, mm_itemsize) <= budget:
            return 1, chunk
        return None

    req_steps = 1 if B == 1 else min(B, 4)      # >= 2 steps per v7x core when possible
    for tb in range(B, 0, -1):
        if pl.cdiv(B, tb) < req_steps:
            continue
        if _mono_vmem_bytes(tb, C, n_blk, n_blk, itemsize, mm_itemsize) <= budget:
            return tb, n_blk

    # tb = 1 with an in-kernel N chunk small enough for the budget.
    base = _mono_vmem_bytes(1, C, n_blk, 0, itemsize, mm_itemsize)
    room = budget - base
    per_col = C * (16 + 2 * mm_itemsize)
    if room >= per_col * _LANE:
        chunk = int(min(n_blk, (room // per_col) // _LANE * _LANE))
        return 1, chunk
    return None


def _forward_monolithic(x3, gamma, eps, H, W, matmul_dtype, tb, chunk, vlim):
    B, C, N = x3.shape
    n_blk = _round_up(N, _LANE)
    kernel = functools.partial(_mono_kernel, eps=eps, n_valid=N, chunk=chunk,
                               matmul_dtype=matmul_dtype)
    out3 = pl.pallas_call(
        kernel,
        out_shape=jax.ShapeDtypeStruct((B, C, N), x3.dtype),
        grid_spec=pltpu.PrefetchScalarGridSpec(
            num_scalar_prefetch=1,                 # gamma lives in SMEM
            grid=(pl.cdiv(B, tb),),
            in_specs=[pl.BlockSpec((tb, C, n_blk), lambda i, g: (i, 0, 0))],
            out_specs=pl.BlockSpec((tb, C, n_blk), lambda i, g: (i, 0, 0)),
            scratch_shapes=[pltpu.VMEM((tb, C, C), jnp.float32),
                            pltpu.VMEM((tb, C, 1), jnp.float32)],
        ),
        compiler_params=pltpu.CompilerParams(
            dimension_semantics=("parallel",),
            vmem_limit_bytes=vlim),
    )(gamma, x3)
    return out3.reshape(B, C, H, W)


# ---------------------------------------------------------------------------
# N-tiled path (two passes): pass 1 accumulates stats, pass 2 applies them.
# ---------------------------------------------------------------------------
def _stats_kernel(x_ref, mat_ref, tail_ref, *, eps, n_valid, tn, tiles_per_split,
                  ragged, matmul_dtype):
    j = pl.program_id(2)

    @pl.when(j == 0)
    def _():
        mat_ref[...] = jnp.zeros_like(mat_ref)
        tail_ref[...] = jnp.zeros_like(tail_ref)

    x = x_ref[0]                                                   # (C, tn)
    if x.dtype != jnp.float32:
        x = x.astype(jnp.float32)
    if ragged:
        tile = pl.program_id(1) * tiles_per_split + j
        col = tile * tn + lax.broadcasted_iota(jnp.int32, (1, tn), 1)
        valid = col < n_valid
        x = jnp.where(valid, x, 0.0)
    inv = lax.rsqrt(jnp.sum(x * x, axis=0, keepdims=True))         # (1, tn)
    q = x * inv
    if ragged:
        q = jnp.where(valid, q, 0.0)

    s = jnp.sum(q, axis=0, keepdims=True) + eps                    # (1, tn)
    tail_ref[0, 0] = tail_ref[0, 0] + jnp.sum(q * s, axis=1, keepdims=True)
    mat_ref[0, 0] = mat_ref[0, 0] + lax.dot_general(
        x.astype(matmul_dtype), q.astype(matmul_dtype),
        (((1,), (1,)), ((), ())), preferred_element_type=jnp.float32)


def _apply_kernel(gamma_ref, x_ref, mat_ref, tail_ref, o_ref, *, matmul_dtype):
    # No masking needed: every op here is per-column; garbage columns of a
    # ragged last tile produce garbage output columns that are masked on store.
    x = x_ref[0]                                                   # (C, tn)
    if x.dtype != jnp.float32:
        x = x.astype(jnp.float32)
    inv = lax.rsqrt(jnp.sum(x * x, axis=0, keepdims=True))
    q = x * inv
    vs = jnp.sum(x, axis=0, keepdims=True)                         # (1, tn)
    mm = jnp.dot(mat_ref[0], q.astype(matmul_dtype),
                 preferred_element_type=jnp.float32)               # (C, tn)
    o_ref[0] = (x + gamma_ref[0] * (tail_ref[0] * (vs + mm))).astype(o_ref.dtype)


def _forward_tiled(x3, gamma, eps, H, W, block_n, matmul_dtype, budget, vlim):
    B, C, N = x3.shape
    itemsize = x3.dtype.itemsize
    mmi = jnp.dtype(matmul_dtype).itemsize

    tn = max(_LANE, min(_round_up(block_n, _LANE), _round_up(N, _LANE)))
    while tn > _LANE and _tiled_vmem_bytes(C, tn, itemsize, mmi) > budget:
        tn -= _LANE
    num_tiles = pl.cdiv(N, tn)
    ragged = (N % tn) != 0

    # With B == 1, split the N tiles over a second parallel axis so both v7x
    # TensorCores get work in pass 1 (only enabled when it splits exactly).
    n_split = 2 if (B == 1 and num_tiles >= 4 and num_tiles % 2 == 0) else 1
    tiles_per_split = num_tiles // n_split

    part_mat, part_tail = pl.pallas_call(
        functools.partial(_stats_kernel, eps=eps, n_valid=N, tn=tn,
                          tiles_per_split=tiles_per_split, ragged=ragged,
                          matmul_dtype=matmul_dtype),
        out_shape=(jax.ShapeDtypeStruct((B, n_split, C, C), jnp.float32),
                   jax.ShapeDtypeStruct((B, n_split, C, 1), jnp.float32)),
        grid_spec=pltpu.PrefetchScalarGridSpec(
            num_scalar_prefetch=0,
            grid=(B, n_split, tiles_per_split),
            in_specs=[pl.BlockSpec(
                (1, C, tn), lambda b, p, j: (b, 0, p * tiles_per_split + j))],
            out_specs=(pl.BlockSpec((1, 1, C, C), lambda b, p, j: (b, p, 0, 0)),
                       pl.BlockSpec((1, 1, C, 1), lambda b, p, j: (b, p, 0, 0))),
        ),
        compiler_params=pltpu.CompilerParams(
            dimension_semantics=("parallel", "parallel", "arbitrary"),
            vmem_limit_bytes=vlim),
    )(x3)

    # Tiny combine (C^2 per batch): sum the split partials, finalize tailor and
    # cast the matrix to the matmul dtype exactly once.
    matrix = jnp.sum(part_mat, axis=1).astype(matmul_dtype)        # (B, C, C)
    tailor = 1.0 / (N + jnp.sum(part_tail, axis=1))                # (B, C, 1)

    out3 = pl.pallas_call(
        functools.partial(_apply_kernel, matmul_dtype=matmul_dtype),
        out_shape=jax.ShapeDtypeStruct((B, C, N), x3.dtype),
        grid_spec=pltpu.PrefetchScalarGridSpec(
            num_scalar_prefetch=1,                 # gamma lives in SMEM
            grid=(B, num_tiles),
            in_specs=[pl.BlockSpec((1, C, tn), lambda b, j, g: (b, 0, j)),
                      pl.BlockSpec((1, C, C), lambda b, j, g: (b, 0, 0)),
                      pl.BlockSpec((1, C, 1), lambda b, j, g: (b, 0, 0))],
            out_specs=pl.BlockSpec((1, C, tn), lambda b, j, g: (b, 0, j)),
        ),
        compiler_params=pltpu.CompilerParams(
            dimension_semantics=("parallel", "parallel"),
            vmem_limit_bytes=vlim),
    )(gamma, x3, matrix, tailor)
    return out3.reshape(B, C, H, W)


# ---------------------------------------------------------------------------
# Public wrapper
# ---------------------------------------------------------------------------
def channel_linear_attention(x, gamma, eps=1e-6, *, block_n=1024,
                             force_tiled=False, matmul_dtype=None,
                             mono_chunk=None):
    """x: (B, C, H, W); gamma: (1,) float32 (the module's Parameter).

    Matches ChannelLinearAttention.forward.  Notes:
      * A pixel whose channel vector is all zeros yields inf/NaN, exactly like
        the raw-norm divide in the PyTorch reference.
      * The module's final .view only round-trips for square spatial dims;
        this implementation reshapes (B, C, N) -> (B, C, H, W) accordingly.
    """
    B, C, H, W = x.shape
    N = H * W
    x3 = x.reshape(B, C, N)
    gamma = jnp.asarray(gamma, jnp.float32).reshape(1)

    if matmul_dtype is None:
        # bf16 MXU operands (fp32 accumulation) once C is large enough to feed
        # the MXU; keeps the kernel memory-bound on v5e as well.
        matmul_dtype = jnp.bfloat16 if C >= 256 else jnp.float32
    matmul_dtype = jnp.dtype(matmul_dtype)

    budget, vlim = _vmem_budget_and_limit()
    itemsize = x3.dtype.itemsize
    mmi = matmul_dtype.itemsize

    if not force_tiled:
        cfg = _choose_mono_config(B, C, N, itemsize, mmi, budget, mono_chunk)
        if cfg is not None:
            tb, chunk = cfg
            return _forward_monolithic(x3, gamma, eps, H, W, matmul_dtype,
                                       tb, chunk, vlim)
    return _forward_tiled(x3, gamma, eps, H, W, block_n, matmul_dtype,
                          budget, vlim)


def _reference(x, gamma, eps=1e-6):
    # Pure-JAX reference mirroring the PyTorch forward exactly.
    B, C, H, W = x.shape
    N = H * W
    xv = x.reshape(B, C, N).astype(jnp.float32)
    norm = jnp.sqrt(jnp.sum(xv * xv, axis=-2))                 # (B, N)
    Q = xv / norm[:, None, :]
    K = jnp.transpose(Q, (0, 2, 1))                            # (B, N, C)
    tailor = 1.0 / (N + jnp.einsum('bnc,bn->bc', K, jnp.sum(Q, axis=-2) + eps))
    value_sum = jnp.sum(xv, axis=-2)[:, None, :]               # (B, 1, N)
    matrix = jnp.einsum('bcn,bnm->bcm', xv, K)                 # (B, C, C)
    matrix_sum = value_sum + jnp.einsum('bcm,bmn->bcn', matrix, Q)
    weight = jnp.einsum('bcn,bc->bcn', matrix_sum, tailor)
    return (xv + gamma[0] * weight).reshape(B, C, H, W)


if __name__ == "__main__":
    key = jax.random.PRNGKey(0)
    ks = jax.random.split(key, 8)
    gamma0 = jnp.zeros((1,), jnp.float32)
    gamma1 = jnp.full((1,), 0.5, jnp.float32)

    def check(x, out, gamma, atol=1e-4, rtol=1e-4, msg=""):
        ref = _reference(x, gamma)
        assert jnp.allclose(out, ref, atol=atol, rtol=rtol), msg

    # 1) module-context shape, gamma = 0 (Parameter init) -> output == input.
    x1 = jax.random.normal(ks[0], (2, 4, 16, 16), jnp.float32)
    out = jax.block_until_ready(channel_linear_attention(x1, gamma0))
    assert jnp.allclose(out, x1, atol=1e-5), "gamma=0 should return x"

    # 2) monolithic path, lane-dense N.
    out = jax.block_until_ready(channel_linear_attention(x1, gamma1))
    check(x1, out, gamma1, msg="mono mismatch")

    # 3) monolithic, ragged lanes (N = 100 inside a 128-wide block).
    x2 = jax.random.normal(ks[1], (2, 8, 10, 10), jnp.float32)
    out = jax.block_until_ready(channel_linear_attention(x2, gamma1))
    check(x2, out, gamma1, msg="mono ragged-lane mismatch")

    # 4) monolithic, tb = 2 batched-einsum path.
    x3 = jax.random.normal(ks[2], (8, 8, 8, 8), jnp.float32)
    out = jax.block_until_ready(channel_linear_attention(x3, gamma1))
    check(x3, out, gamma1, msg="mono batched mismatch")

    # 5) monolithic, ragged last batch block (B = 9, tb = 2).
    x4 = jax.random.normal(ks[3], (9, 4, 8, 8), jnp.float32)
    out = jax.block_until_ready(channel_linear_attention(x4, gamma1))
    check(x4, out, gamma1, msg="mono ragged-batch mismatch")

    # 6) monolithic with forced in-kernel N chunking (pl.loop + tail chunk).
    x5 = jax.random.normal(ks[4], (1, 8, 18, 18), jnp.float32)
    out = jax.block_until_ready(channel_linear_attention(x5, gamma1, mono_chunk=128))
    check(x5, out, gamma1, msg="mono chunked mismatch")
    out = jax.block_until_ready(channel_linear_attention(x5, gamma1, mono_chunk=256))
    check(x5, out, gamma1, msg="mono chunked-tail mismatch")

    # 7) tiled path, ragged last N tile.
    x6 = jax.random.normal(ks[5], (2, 8, 18, 18), jnp.float32)
    out = jax.block_until_ready(
        channel_linear_attention(x6, gamma1, block_n=128, force_tiled=True))
    check(x6, out, gamma1, msg="tiled mismatch")

    # 8) tiled path, B = 1 -> stats pass split across two parallel groups.
    x7 = jax.random.normal(ks[6], (1, 8, 32, 16), jnp.float32)
    out = jax.block_until_ready(
        channel_linear_attention(x7, gamma1, block_n=128, force_tiled=True))
    check(x7, out, gamma1, msg="tiled split mismatch")

    # 9) bf16 MXU operands (fp32 accumulation), both paths, loose tolerance.
    x8 = jax.random.normal(ks[7], (2, 8, 16, 16), jnp.float32)
    out = jax.block_until_ready(
        channel_linear_attention(x8, gamma1, matmul_dtype=jnp.bfloat16))
    check(x8, out, gamma1, atol=5e-2, rtol=5e-2, msg="mono bf16 mismatch")
    out = jax.block_until_ready(
        channel_linear_attention(x8, gamma1, matmul_dtype=jnp.bfloat16,
                                 block_n=128, force_tiled=True))
    check(x8, out, gamma1, atol=5e-2, rtol=5e-2, msg="tiled bf16 mismatch")

    print("KERNEL_OK")
</pallas_src>

<mosaic_0001>
module attributes {stable_mosaic.version = 11 : i64} {
  func.func @_mono_kernel(%arg0: i32, %arg1: memref<1xf32, #tpu.memory_space<smem>>, %arg2: memref<1x4x256xf32, #tpu.memory_space<vmem>>, %arg3: memref<1x4x256xf32, #tpu.memory_space<vmem>>, %arg4: memref<1x4x4xf32, #tpu.memory_space<vmem>>, %arg5: memref<1x4x1xf32, #tpu.memory_space<vmem>>) attributes {dimension_semantics = [#tpu.dimension_semantics<parallel>], iteration_bounds = array<i64: 2>, scalar_prefetch = 1 : i64, scratch_operands = 2 : i64, tpu.core_type = #tpu.core_type<tc>, window_params = [{transform_indices = @transform_0, window_bounds = array<i64: 1, 4, 256>}, {transform_indices = @transform_1, window_bounds = array<i64: 1, 4, 256>}]} {
    %cst = arith.constant 0.000000e+00 : f32
    %0 = vector.broadcast %cst : f32 to vector<1x4x4xf32>
    %c0 = arith.constant 0 : index
    %c0_0 = arith.constant 0 : index
    %c0_1 = arith.constant 0 : index
    %1 = vector.load %arg4[%c0, %c0_0, %c0_1] : memref<1x4x4xf32, #tpu.memory_space<vmem>>, vector<1x4x4xf32>
    tpu.vector_store %arg4[%c0, %c0_0, %c0_1], %0 {strides = array<i32>} : memref<1x4x4xf32, #tpu.memory_space<vmem>>, vector<1x4x4xf32>,
    %cst_2 = arith.constant 0.000000e+00 : f32
    %2 = vector.broadcast %cst_2 : f32 to vector<1x4x1xf32>
    %c0_3 = arith.constant 0 : index
    %c0_4 = arith.constant 0 : index
    %c0_5 = arith.constant 0 : index
    %3 = vector.load %arg5[%c0_3, %c0_4, %c0_5] : memref<1x4x1xf32, #tpu.memory_space<vmem>>, vector<1x4x1xf32>
    tpu.vector_store %arg5[%c0_3, %c0_4, %c0_5], %2 {strides = array<i32>} : memref<1x4x1xf32, #tpu.memory_space<vmem>>, vector<1x4x1xf32>,
    %c0_6 = arith.constant 0 : index
    %c0_7 = arith.constant 0 : index
    %c0_8 = arith.constant 0 : index
    %4 = vector.load %arg2[%c0_6, %c0_7, %c0_8] : memref<1x4x256xf32, #tpu.memory_space<vmem>>, vector<1x4x256xf32>
    %5 = arith.mulf %4, %4 : vector<1x4x256xf32>
    %cst_9 = arith.constant dense<0.000000e+00> : vector<1x256xf32>
    %6 = vector.multi_reduction <add>, %5, %cst_9 [1] : vector<1x4x256xf32> to vector<1x256xf32>
    %7 = vector.shape_cast %6 : vector<1x256xf32> to vector<1x1x256xf32>
    %8 = math.rsqrt %7 : vector<1x1x256xf32>
    %9 = vector.broadcast %8 : vector<1x1x256xf32> to vector<1x4x256xf32>
    %10 = arith.mulf %4, %9 : vector<1x4x256xf32>
    %cst_10 = arith.constant dense<0.000000e+00> : vector<1x256xf32>
    %11 = vector.multi_reduction <add>, %10, %cst_10 [1] : vector<1x4x256xf32> to vector<1x256xf32>
    %12 = vector.shape_cast %11 : vector<1x256xf32> to vector<1x1x256xf32>
    %cst_11 = arith.constant 9.99999997E-7 : f32
    %13 = vector.broadcast %cst_11 : f32 to vector<1x1x256xf32>
    %14 = arith.addf %12, %13 : vector<1x1x256xf32>
    %c0_12 = arith.constant 0 : index
    %c0_13 = arith.constant 0 : index
    %c0_14 = arith.constant 0 : index
    %15 = vector.load %arg5[%c0_12, %c0_13, %c0_14] : memref<1x4x1xf32, #tpu.memory_space<vmem>>, vector<1x4x1xf32>
    %16 = vector.broadcast %14 : vector<1x1x256xf32> to vector<1x4x256xf32>
    %17 = arith.mulf %10, %16 : vector<1x4x256xf32>
    %cst_15 = arith.constant dense<0.000000e+00> : vector<1x4xf32>
    %18 = vector.multi_reduction <add>, %17, %cst_15 [2] : vector<1x4x256xf32> to vector<1x4xf32>
    %19 = vector.shape_cast %18 : vector<1x4xf32> to vector<1x4x1xf32>
    %20 = arith.addf %15, %19 : vector<1x4x1xf32>
    %c0_16 = arith.constant 0 : index
    %c0_17 = arith.constant 0 : index
    %c0_18 = arith.constant 0 : index
    %21 = vector.load %arg5[%c0_16, %c0_17, %c0_18] : memref<1x4x1xf32, #tpu.memory_space<vmem>>, vector<1x4x1xf32>
    tpu.vector_store %arg5[%c0_16, %c0_17, %c0_18], %20 {strides = array<i32>} : memref<1x4x1xf32, #tpu.memory_space<vmem>>, vector<1x4x1xf32>,
    %c0_19 = arith.constant 0 : index
    %c0_20 = arith.constant 0 : index
    %c0_21 = arith.constant 0 : index
    %22 = vector.load %arg4[%c0_19, %c0_20, %c0_21] : memref<1x4x4xf32, #tpu.memory_space<vmem>>, vector<1x4x4xf32>
    %23 = vector.shape_cast %4 : vector<1x4x256xf32> to vector<4x256xf32>
    %24 = vector.shape_cast %10 : vector<1x4x256xf32> to vector<4x256xf32>
    %cst_22 = arith.constant dense<0.000000e+00> : vector<4x4xf32>
    %25 = tpu.matmul %23, %24, %cst_22 {dimension_numbers = #tpu.dot_dimension_numbers<[1], [1], [0], [0], [0, 0, 1, 0], [], []>} : vector<4x256xf32>, vector<4x256xf32>, vector<4x4xf32> -> vector<4x4xf32>
    %26 = vector.shape_cast %25 : vector<4x4xf32> to vector<1x4x4xf32>
    %27 = arith.addf %22, %26 : vector<1x4x4xf32>
    %c0_23 = arith.constant 0 : index
    %c0_24 = arith.constant 0 : index
    %c0_25 = arith.constant 0 : index
    %28 = vector.load %arg4[%c0_23, %c0_24, %c0_25] : memref<1x4x4xf32, #tpu.memory_space<vmem>>, vector<1x4x4xf32>
    tpu.vector_store %arg4[%c0_23, %c0_24, %c0_25], %27 {strides = array<i32>} : memref<1x4x4xf32, #tpu.memory_space<vmem>>, vector<1x4x4xf32>,
    %c0_26 = arith.constant 0 : index
    %c0_27 = arith.constant 0 : index
    %c0_28 = arith.constant 0 : index
    %29 = vector.load %arg5[%c0_26, %c0_27, %c0_28] : memref<1x4x1xf32, #tpu.memory_space<vmem>>, vector<1x4x1xf32>
    %cst_29 = arith.constant 2.560000e+02 : f32
    %30 = vector.broadcast %cst_29 : f32 to vector<1x4x1xf32>
    %31 = arith.addf %30, %29 : vector<1x4x1xf32>
    %cst_30 = arith.constant 1.000000e+00 : f32
    %32 = vector.broadcast %cst_30 : f32 to vector<1x4x1xf32>
    %33 = arith.divf %32, %31 : vector<1x4x1xf32>
    %c0_31 = arith.constant 0 : index
    %c0_32 = arith.constant 0 : index
    %c0_33 = arith.constant 0 : index
    %34 = vector.load %arg4[%c0_31, %c0_32, %c0_33] : memref<1x4x4xf32, #tpu.memory_space<vmem>>, vector<1x4x4xf32>
    %c0_34 = arith.constant 0 : index
    %35 = memref.load %arg1[%c0_34] : memref<1xf32, #tpu.memory_space<smem>>
    %c0_35 = arith.constant 0 : index
    %c0_36 = arith.constant 0 : index
    %c0_37 = arith.constant 0 : index
    %36 = vector.load %arg2[%c0_35, %c0_36, %c0_37] : memref<1x4x256xf32, #tpu.memory_space<vmem>>, vector<1x4x256xf32>
    %37 = arith.mulf %36, %36 : vector<1x4x256xf32>
    %cst_38 = arith.constant dense<0.000000e+00> : vector<1x256xf32>
    %38 = vector.multi_reduction <add>, %37, %cst_38 [1] : vector<1x4x256xf32> to vector<1x256xf32>
    %39 = vector.shape_cast %38 : vector<1x256xf32> to vector<1x1x256xf32>
    %40 = math.rsqrt %39 : vector<1x1x256xf32>
    %41 = vector.broadcast %40 : vector<1x1x256xf32> to vector<1x4x256xf32>
    %42 = arith.mulf %36, %41 : vector<1x4x256xf32>
    %cst_39 = arith.constant dense<0.000000e+00> : vector<1x256xf32>
    %43 = vector.multi_reduction <add>, %36, %cst_39 [1] : vector<1x4x256xf32> to vector<1x256xf32>
    %44 = vector.shape_cast %43 : vector<1x256xf32> to vector<1x1x256xf32>
    %45 = vector.shape_cast %34 : vector<1x4x4xf32> to vector<4x4xf32>
    %46 = vector.shape_cast %42 : vector<1x4x256xf32> to vector<4x256xf32>
    %cst_40 = arith.constant dense<0.000000e+00> : vector<4x256xf32>
    %47 = tpu.matmul %45, %46, %cst_40 {dimension_numbers = #tpu.dot_dimension_numbers<[1], [0], [0], [1], [0, 0, 1, 1], [], []>} : vector<4x4xf32>, vector<4x256xf32>, vector<4x256xf32> -> vector<4x256xf32>
    %48 = vector.shape_cast %47 : vector<4x256xf32> to vector<1x4x256xf32>
    %49 = vector.broadcast %44 : vector<1x1x256xf32> to vector<1x4x256xf32>
    %50 = arith.addf %49, %48 : vector<1x4x256xf32>
    %51 = vector.broadcast %33 : vector<1x4x1xf32> to vector<1x4x256xf32>
    %52 = arith.mulf %51, %50 : vector<1x4x256xf32>
    %53 = vector.broadcast %35 : f32 to vector<1x4x256xf32>
    %54 = arith.mulf %53, %52 : vector<1x4x256xf32>
    %55 = arith.addf %36, %54 : vector<1x4x256xf32>
    %c0_41 = arith.constant 0 : index
    %c0_42 = arith.constant 0 : index
    %c0_43 = arith.constant 0 : index
    %56 = vector.load %arg3[%c0_41, %c0_42, %c0_43] : memref<1x4x256xf32, #tpu.memory_space<vmem>>, vector<1x4x256xf32>
    tpu.vector_store %arg3[%c0_41, %c0_42, %c0_43], %55 {strides = array<i32>} : memref<1x4x256xf32, #tpu.memory_space<vmem>>, vector<1x4x256xf32>,
    return
  }
  func.func @transform_0(%arg0: i32, %arg1: memref<1xf32, #tpu.memory_space<smem>>) -> (i32, i32, i32) {
    %c0_i32 = arith.constant 0 : i32
    %c0_i32_0 = arith.constant 0 : i32
    %c0_i32_1 = arith.constant 0 : i32
    return %arg0, %c0_i32, %c0_i32_0 : i32, i32, i32
  }
  func.func @transform_1(%arg0: i32, %arg1: memref<1xf32, #tpu.memory_space<smem>>) -> (i32, i32, i32) {
    %c0_i32 = arith.constant 0 : i32
    %c0_i32_0 = arith.constant 0 : i32
    %c0_i32_1 = arith.constant 0 : i32
    return %arg0, %c0_i32, %c0_i32_0 : i32, i32, i32
  }
}

</mosaic_0001>

<llo_original>
// kernel: tpu_custom_call.1
$region0: #{tpu_custom_call.1}
  #allocation0 [shape = 'u32[]', space=smem, size = 0x4, offset = 0x4, fixed_abs, tag = 'smem constant byte address 0x4 - core index']
  #allocation1 [shape = 'u32[144,128]{1,0:T(1,128)}', space=vmem, size = 0x12000, scoped, tag = 'internal scratch']
  #allocation2 [shape = 'f32[1,4,4]{2,1,0:T(4,128)}', space=vmem, size = 0x800, scoped, tag = 'scratch operand']
  #allocation3 [shape = 'f32[1,4,1]{2,1,0:T(4,128)}', space=vmem, size = 0x800, scoped, tag = 'scratch operand']
  #allocation4 [shape = 's32[1]{0}', space=sflag, size = 0x4, scoped, tag = 'scoped memory for tpu_custom_call.1']
  #allocation5 [shape = 'f32[1]{0:T(128)S(6)}', space=smem, size = 0x200, scoped, tag = 'prefetched SMEM operand 0']
  %s0 = inlined_call_operand.<no memory space> [shape: f32[1], index: 0, kind: input, shape index: {}]
  %s1 = inlined_call_operand.hbm [shape: f32[2,4,256], index: 1, kind: input, shape index: {}]
  %s2 = inlined_call_operand.hbm [shape: f32[2,4,256], index: 2, kind: output, shape index: {}]
  %s3 = sld [smem:[#allocation0]]
  $region41: #{tpu_custom_call.1} parent=0
    _
  %s5 = ssub.s32 1, %s3
  %s6 = scalar_select 0, %s5, %s3
  %7 = sst [smem:[#allocation5]] %s0
  $region1: #{tpu_custom_call.1} parent=0
    #allocation6 [shape = 'u8[8192]{0}', space=vmem, size = 0x2000, scoped, tag = 'input window, operand 1']
    #allocation7 [shape = 's32[2]{0}', space=sflag, size = 0x8, scoped, tag = 'scoped memory for tpu_custom_call.1']
    #allocation8 [shape = 's32[2]{0}', space=sflag, size = 0x8, scoped, tag = 'scoped memory for tpu_custom_call.1']
    #allocation9 [shape = 'u8[8192]{0}', space=vmem, size = 0x2000, scoped, tag = 'output window, operand 0']
    %8 = vsyncpa [#allocation7], 0
    %s9 = scalar_lea.sflag [#allocation7], 1
    %10 = vsyncpa %s9, 0
    %11 = vsyncpa [#allocation8], 0
    %s12 = scalar_lea.sflag [#allocation8], 1
    %13 = vsyncpa %s12, 0
    loop: start=0, step=1, limit=4
    $region2: #{tpu_custom_call.1} parent=1 // loop_pre_header
      _
    $region3: #{tpu_custom_call.1} parent=1 // loop_header
      %s15 = sphi 0, %s19
      %p16 = scmp.ge.s32.totalorder %s15, 4
      %s25 = sphi 0, %s27
      %s28 = sphi 0, %s25
      %s29 = sphi 0, %s28
      %s45 = sphi 0, %s29
      %s51 = sphi 0, %s53
      %s54 = sphi 0, %s51
      %s55 = sphi 0, %s54
      %s71 = sphi 0, %s55
    $region4: #{tpu_custom_call.1} parent=1 // loop_header_branch
      %18 = sbr.rel (%p16) target = $region8
    $region5: #{tpu_custom_call.1} parent=1 // loop_body
      %s20 = ssub.s32 %s15, 1
      %s21 = ssub.s32 %s15, 2
      %s22 = sadd.s32 %s15, 1
      %s23 = ssub.s32 %s15, %s22
      %p24 = scmp.eq.s32.totalorder %s23, 0
      %s26 = sadd.s32 %s25, 1
      %s27 = scalar_select %p24, %s25, %s26
      %p30 = pneg %p24
      %p31 = scmp.eq.s32.totalorder %s15, 1
      %p32 = por %p30, %p31
      %p33 = scmp.ne.s32.totalorder %s25, %s28
      %p34 = scmp.eq.s32.totalorder %s15, 0
      %p35 = por %p33, %p34
      %p36 = scmp.ne.s32.totalorder %s25, %s28
      %p37 = scmp.eq.s32.totalorder %s20, 1
      %p38 = por %p36, %p37
      %p39 = scmp.ne.s32.totalorder %s28, %s29
      %p40 = scmp.eq.s32.totalorder %s20, 0
      %p41 = por %p39, %p40
      %p42 = scmp.ne.s32.totalorder %s28, %s29
      %p43 = scmp.eq.s32.totalorder %s21, 1
      %p44 = por %p42, %p43
      %p46 = scmp.ne.s32.totalorder %s29, %s45
      %p47 = scmp.eq.s32.totalorder %s21, 0
      %p48 = por %p46, %p47
      %s49 = ssub.s32 %s15, %s22
      %p50 = scmp.eq.s32.totalorder %s49, 0
      %s52 = sadd.s32 %s51, 1
      %s53 = scalar_select %p50, %s51, %s52
      %p56 = pneg %p50
      %p57 = scmp.eq.s32.totalorder %s15, 1
      %p58 = por %p56, %p57
      %p59 = scmp.ne.s32.totalorder %s51, %s54
      %p60 = scmp.eq.s32.totalorder %s15, 0
      %p61 = por %p59, %p60
      %p62 = scmp.ne.s32.totalorder %s51, %s54
      %p63 = scmp.eq.s32.totalorder %s20, 1
      %p64 = por %p62, %p63
      %p65 = scmp.ne.s32.totalorder %s54, %s55
      %p66 = scmp.eq.s32.totalorder %s20, 0
      %p67 = por %p65, %p66
      %p68 = scmp.ne.s32.totalorder %s54, %s55
      %p69 = scmp.eq.s32.totalorder %s21, 1
      %p70 = por %p68, %p69
      %p72 = scmp.ne.s32.totalorder %s55, %s71
      %p73 = scmp.eq.s32.totalorder %s21, 0
      %p74 = por %p72, %p73
      %p75 = scmp.le.s32.totalorder 1, %s15
      %p76 = scmp.lt.s32.totalorder %s15, 3
      %p77 = pnand %p75, %p76
      %p78 = pneg %p77
      // Predicated region
      $region9: #{tpu_custom_call.1} parent=5 // pred_check
        _
      $region10: #{tpu_custom_call.1} parent=5 // pred_check_branch
        %80 = sbr.rel (%p77) target = $region12
      $region11: #{tpu_custom_call.1} parent=5 // pred_region
        %s81 = ssub.s32 %s15, 1
      $region12: #{tpu_custom_call.1} parent=5 // pred_fallthru
        _
      %p82 = scmp.lt.s32.totalorder %s15, 2
      // Predicated region
      $region13: #{tpu_custom_call.1} parent=5 // pred_check
        %p83 = pneg %p82
      $region14: #{tpu_custom_call.1} parent=5 // pred_check_branch
        %85 = sbr.rel (%p83) target = $region16
      $region15: #{tpu_custom_call.1} parent=5 // pred_region
        // Predicated region
        $region17: #{tpu_custom_call.1} parent=15 // pred_check
          %p86 = pneg %p35
        $region18: #{tpu_custom_call.1} parent=15 // pred_check_branch
          %88 = sbr.rel (%p86) target = $region20
        $region19: #{tpu_custom_call.1} parent=15 // pred_region
          %s89 = sand.u32 %s25, 1
          %s90 = scalar_lea.sflag [#allocation7], %s89
          %s91 = sand.u32 %s25, 1
          %s92 = smul.addr %s91, 8
          %s93 = scalar_lea.vmem [#allocation6], %s92
          %s95 = ssub.s32 128, 128
          %96 = vsyncadd %s90, %s95
          %s97 = smul.addr %s15, 2
          %s98 = smul.addr %s97, 64
          %s99 = scalar_lea.hbm %s1, %s98
          %s101 = sshll.u32 %s93, 4
          %s102 = int_to_ptr.vmem [resolvable:$true] %s101
          %104 = dma.hbm_to_vmem [thread:$0]  %s99, 128, %s102, %s90
        $region20: #{tpu_custom_call.1} parent=15 // pred_fallthru
          _
      $region16: #{tpu_custom_call.1} parent=5 // pred_fallthru
        _
      %p105 = scmp.le.s32.totalorder 1, %s15
      %p106 = scmp.lt.s32.totalorder %s15, 3
      %p107 = pnand %p105, %p106
      %p108 = pneg %p107
      // Predicated region
      $region21: #{tpu_custom_call.1} parent=5 // pred_check
        _
      $region22: #{tpu_custom_call.1} parent=5 // pred_check_branch
        %110 = sbr.rel (%p107) target = $region24
      $region23: #{tpu_custom_call.1} parent=5 // pred_region
        %s111 = ssub.s32 %s15, 1
        %s112 = sand.u32 %s28, 1
        %s113 = scalar_lea.sflag [#allocation7], %s112
        %s114 = sand.u32 %s28, 1
        %s115 = smul.addr %s114, 8
        %s116 = scalar_lea.vmem [#allocation6], %s115
        // Predicated region
        $region25: #{tpu_custom_call.1} parent=23 // pred_check
          %p117 = pneg %p41
        $region26: #{tpu_custom_call.1} parent=23 // pred_check_branch
          %119 = sbr.rel (%p117) target = $region28
        $region27: #{tpu_custom_call.1} parent=23 // pred_region
          %120 = dma.done %s113, 128
        $region28: #{tpu_custom_call.1} parent=23 // pred_fallthru
          _
        %s121 = sand.u32 %s28, 1
        %s122 = scalar_lea.sflag [#allocation7], %s121
        %s123 = sand.u32 %s28, 1
        %s124 = smul.addr %s123, 8
        %s125 = scalar_lea.vmem [#allocation6], %s124
        %p126 = pneg %p41
        %p127 = pneg %p38
        %p128 = pneg %p67
        %p129 = pneg %p64
        %s130 = sand.u32 %s54, 1
        %s131 = scalar_lea.sflag [#allocation8], %s130
        %s132 = sand.u32 %s54, 1
        %s133 = smul.addr %s132, 8
        %s134 = scalar_lea.vmem [#allocation9], %s133
        %vm135 = vcmask 27648
        %136 = vst.msk [vmem:[#allocation2] sm:$0xf] %vm135, 0.0
        %vm137 = vcmask 3072
        %138 = vst.msk [vmem:[#allocation3] sm:$0xf] %vm137, 0.0
        %v139 = vld [vmem:[%s116] sm:$0xff]
        %v140 = vmul.f32 %v139, %v139
        %v142 = vcombine.high %v140, %v140
        %vm144 = vcmask 1043456
        %v145 = vsel %vm144, %v140, 0.0
        %v146 = vrot.slane %v145, 4
        %v147 = vadd.f32 %v145, %v146
        %v148 = vrot.slane %v147, 2
        %v149 = vadd.f32 %v147, %v148
        %v150 = vrot.slane %v149, 1
        %v151 = vadd.f32 %v149, %v150
        %v152 = vsel %vm144, %v142, 0.0
        %v153 = vrot.slane %v152, 4
        %v154 = vadd.f32 %v152, %v153
        %v155 = vrot.slane %v154, 2
        %v156 = vadd.f32 %v154, %v155
        %v157 = vrot.slane %v156, 1
        %v158 = vadd.f32 %v156, %v157
        %v159 = vrsqrt.pop %v151
        %v160 = vrsqrt.pop %v158
        %v163 = vcombine.low %v159, %v160
        %v165 = vmul.f32 %v139, %v163
        %v167 = vcombine.high %v165, %v165
        %v169 = vsel %vm144, %v165, 0.0
        %v170 = vrot.slane %v169, 4
        %v171 = vadd.f32 %v169, %v170
        %v172 = vrot.slane %v171, 2
        %v173 = vadd.f32 %v171, %v172
        %v174 = vrot.slane %v173, 1
        %v175 = vadd.f32 %v173, %v174
        %v176 = vsel %vm144, %v167, 0.0
        %v177 = vrot.slane %v176, 4
        %v178 = vadd.f32 %v176, %v177
        %v179 = vrot.slane %v178, 2
        %v180 = vadd.f32 %v178, %v179
        %v181 = vrot.slane %v180, 1
        %v182 = vadd.f32 %v180, %v181
        %v183 = vadd.f32 %v175, 1e-06
        %v184 = vadd.f32 %v182, 1e-06
        %v185 = vld [vmem:[#allocation3] sm:$0xf]
        %v188 = vcombine.low %v183, %v184
        %v190 = vmul.f32 %v165, %v188
        %v192 = vcombine.high %v190, %v190
        %v194 = vsel %vm144, %v190, 0.0
        %v195 = vsel %vm144, %v192, 0.0
        %v196 = vadd.f32 %v194, %v195
        %197 = vadd.xlane.f32.xlu0 %v196
        %v198 = vpop.xlane.xlu0 %197
        %v199 = vadd.f32 %v185, %v198
        %200 = vst.msk [vmem:[#allocation3] sm:$0xf] %vm137, %v199
        %v201 = vld [vmem:[#allocation2] sm:$0xf]
        %v203 = vcombine.high %v139, %v139
        %205 = vmatprep.subr.mxu0 0.0
        %206 = vmatpush1.xpose.msra.mxu0 0.0
        %207 = vmatprep.subr.mxu0 0.0
        %208 = vmatpush1.xpose.msra.mxu0 0.0
        %209 = vmatprep.subr.mxu0 0.0
        %210 = vmatpush1.xpose.msra.mxu0 0.0
        %211 = vmatprep.subr.mxu0 0.0
        %212 = vmatpush1.xpose.msra.mxu0 0.0
        %213 = vmatprep.subr.mxu0 0.0
        %214 = vmatpush1.xpose.msra.mxu0 0.0
        %215 = vmatprep.subr.mxu0 0.0
        %216 = vmatpush1.xpose.msra.mxu0 0.0
        %217 = vmatprep.subr.mxu0 0.0
        %218 = vmatpush1.xpose.msra.mxu0 0.0
        %219 = vmatprep.subr.mxu0 0.0
        %220 = vmatpush1.xpose.msra.mxu0 0.0
        %221 = vmatprep.subr.mxu0 0.0
        %222 = vmatpush1.xpose.msra.mxu0 0.0
        %223 = vmatprep.subr.mxu0 0.0
        %224 = vmatpush1.xpose.msra.mxu0 0.0
        %225 = vmatprep.subr.mxu0 0.0
        %226 = vmatpush1.xpose.msra.mxu0 0.0
        %227 = vmatprep.subr.mxu0 0.0
        %228 = vmatpush1.xpose.msra.mxu0 0.0
        %229 = vmatprep.subr.mxu0 0.0
        %230 = vmatpush1.xpose.msra.mxu0 0.0
        %231 = vmatprep.subr.mxu0 0.0
        %232 = vmatpush1.xpose.msra.mxu0 0.0
        %233 = vmatprep.subr.mxu0 0.0
        %234 = vmatpush1.xpose.msra.mxu0 0.0
        %235 = vmatprep.subr.mxu0 %v167
        %236 = vmatpush1.xpose.msra.mxu0 %v165
        %237 = vmatprep.subr.mxu0 0.0
        %238 = vmatpush2.xpose.msra.mxu0 0.0
        %239 = vmatprep.subr.mxu0 0.0
        %240 = vmatpush2.xpose.msra.mxu0 0.0
        %241 = vmatprep.subr.mxu0 0.0
        %242 = vmatpush2.xpose.msra.mxu0 0.0
        %243 = vmatprep.subr.mxu0 0.0
        %244 = vmatpush2.xpose.msra.mxu0 0.0
        %245 = vmatprep.subr.mxu0 0.0
        %246 = vmatpush2.xpose.msra.mxu0 0.0
        %247 = vmatprep.subr.mxu0 0.0
        %248 = vmatpush2.xpose.msra.mxu0 0.0
        %249 = vmatprep.subr.mxu0 0.0
        %250 = vmatpush2.xpose.msra.mxu0 0.0
        %251 = vmatprep.subr.mxu0 0.0
        %252 = vmatpush2.xpose.msra.mxu0 0.0
        %253 = vmatprep.subr.mxu0 0.0
        %254 = vmatpush2.xpose.msra.mxu0 0.0
        %255 = vmatprep.subr.mxu0 0.0
        %256 = vmatpush2.xpose.msra.mxu0 0.0
        %257 = vmatprep.subr.mxu0 0.0
        %258 = vmatpush2.xpose.msra.mxu0 0.0
        %259 = vmatprep.subr.mxu0 0.0
        %260 = vmatpush2.xpose.msra.mxu0 0.0
        %261 = vmatprep.subr.mxu0 0.0
        %262 = vmatpush2.xpose.msra.mxu0 0.0
        %263 = vmatprep.subr.mxu0 0.0
        %264 = vmatpush2.xpose.msra.mxu0 0.0
        %265 = vmatprep.subr.mxu0 0.0
        %266 = vmatpush2.xpose.msra.mxu0 0.0
        %267 = vmatprep.subr.mxu0 0.0
        %268 = vmatpush2.xpose.msra.mxu0 0.0
        %269 = vmatprep.mubr.f32.mxu0 %v203
        %270 = vmatmul.mubr.f32.gmra.mxu0 %v139
        %v271 = vpop.f32.mrf.mxu0
        %v272 = vadd.f32 0.0, %v271
        %v273 = vpop.f32.mrf.mxu0
        %274 = vdwg.mxu0
        %v275 = vadd.f32 %v201, %v272
        %276 = vst.msk [vmem:[#allocation2] sm:$0xf] %vm135, %v275
        %v277 = vld [vmem:[#allocation3] sm:$0xf]
        %v278 = vadd.f32 %v277, 256.0
        %v279 = vrcp.pop %v278
        %v280 = vmul.f32 1.0, %v279
        %v281 = vld [vmem:[#allocation2] sm:$0xf]
        %s282 = sld [smem:[#allocation5]]
        %v283 = vld [vmem:[%s116] sm:$0xff]
        %v284 = vmul.f32 %v283, %v283
        %v286 = vcombine.high %v284, %v284
        %v288 = vsel %vm144, %v284, 0.0
        %v289 = vrot.slane %v288, 4
        %v290 = vadd.f32 %v288, %v289
        %v291 = vrot.slane %v290, 2
        %v292 = vadd.f32 %v290, %v291
        %v293 = vrot.slane %v292, 1
        %v294 = vadd.f32 %v292, %v293
        %v295 = vsel %vm144, %v286, 0.0
        %v296 = vrot.slane %v295, 4
        %v297 = vadd.f32 %v295, %v296
        %v298 = vrot.slane %v297, 2
        %v299 = vadd.f32 %v297, %v298
        %v300 = vrot.slane %v299, 1
        %v301 = vadd.f32 %v299, %v300
        %v302 = vrsqrt.pop %v294
        %v303 = vrsqrt.pop %v301
        %v306 = vcombine.low %v302, %v303
        %v308 = vmul.f32 %v283, %v306
        %v310 = vcombine.high %v283, %v283
        %v312 = vsel %vm144, %v283, 0.0
        %v313 = vrot.slane %v312, 4
        %v314 = vadd.f32 %v312, %v313
        %v315 = vrot.slane %v314, 2
        %v316 = vadd.f32 %v314, %v315
        %v317 = vrot.slane %v316, 1
        %v318 = vadd.f32 %v316, %v317
        %v319 = vsel %vm144, %v310, 0.0
        %v320 = vrot.slane %v319, 4
        %v321 = vadd.f32 %v319, %v320
        %v322 = vrot.slane %v321, 2
        %v323 = vadd.f32 %v321, %v322
        %v324 = vrot.slane %v323, 1
        %v325 = vadd.f32 %v323, %v324
        %v327 = vcombine.high %v308, %v308
        %vm328 = vcmask 31744
        %v330 = vsel %vm328, %v281, 0
        %v332 = vsel %vm144, %v308, 0
        %v334 = vsel %vm144, %v327, 0
        %336 = vmatprep.subr.mxu0 0.0
        %337 = vmatpush1.msra.mxu0 0.0
        %338 = vmatprep.subr.mxu0 0.0
        %339 = vmatpush1.msra.mxu0 0.0
        %340 = vmatprep.subr.mxu0 0.0
        %341 = vmatpush1.msra.mxu0 0.0
        %342 = vmatprep.subr.mxu0 0.0
        %343 = vmatpush1.msra.mxu0 0.0
        %344 = vmatprep.subr.mxu0 0.0
        %345 = vmatpush1.msra.mxu0 0.0
        %346 = vmatprep.subr.mxu0 0.0
        %347 = vmatpush1.msra.mxu0 0.0
        %348 = vmatprep.subr.mxu0 0.0
        %349 = vmatpush1.msra.mxu0 0.0
        %350 = vmatprep.subr.mxu0 0.0
        %351 = vmatpush1.msra.mxu0 0.0
        %352 = vmatprep.subr.mxu0 0.0
        %353 = vmatpush1.msra.mxu0 0.0
        %354 = vmatprep.subr.mxu0 0.0
        %355 = vmatpush1.msra.mxu0 0.0
        %356 = vmatprep.subr.mxu0 0.0
        %357 = vmatpush1.msra.mxu0 0.0
        %358 = vmatprep.subr.mxu0 0.0
        %359 = vmatpush1.msra.mxu0 0.0
        %360 = vmatprep.subr.mxu0 0.0
        %361 = vmatpush1.msra.mxu0 0.0
        %362 = vmatprep.subr.mxu0 0.0
        %363 = vmatpush1.msra.mxu0 0.0
        %364 = vmatprep.subr.mxu0 0.0
        %365 = vmatpush1.msra.mxu0 0.0
        %366 = vmatprep.subr.mxu0 %v334
        %367 = vmatpush1.msra.mxu0 %v332
        %368 = vmatprep.subr.mxu0 0.0
        %369 = vmatpush2.msra.mxu0 0.0
        %370 = vmatprep.subr.mxu0 0.0
        %371 = vmatpush2.msra.mxu0 0.0
        %372 = vmatprep.subr.mxu0 0.0
        %373 = vmatpush2.msra.mxu0 0.0
        %374 = vmatprep.subr.mxu0 0.0
        %375 = vmatpush2.msra.mxu0 0.0
        %376 = vmatprep.subr.mxu0 0.0
        %377 = vmatpush2.msra.mxu0 0.0
        %378 = vmatprep.subr.mxu0 0.0
        %379 = vmatpush2.msra.mxu0 0.0
        %380 = vmatprep.subr.mxu0 0.0
        %381 = vmatpush2.msra.mxu0 0.0
        %382 = vmatprep.subr.mxu0 0.0
        %383 = vmatpush2.msra.mxu0 0.0
        %384 = vmatprep.subr.mxu0 0.0
        %385 = vmatpush2.msra.mxu0 0.0
        %386 = vmatprep.subr.mxu0 0.0
        %387 = vmatpush2.msra.mxu0 0.0
        %388 = vmatprep.subr.mxu0 0.0
        %389 = vmatpush2.msra.mxu0 0.0
        %390 = vmatprep.subr.mxu0 0.0
        %391 = vmatpush2.msra.mxu0 0.0
        %392 = vmatprep.subr.mxu0 0.0
        %393 = vmatpush2.msra.mxu0 0.0
        %394 = vmatprep.subr.mxu0 0.0
        %395 = vmatpush2.msra.mxu0 0.0
        %396 = vmatprep.subr.mxu0 0.0
        %397 = vmatpush2.msra.mxu0 0.0
        %398 = vmatprep.subr.mxu0 0.0
        %399 = vmatpush2.msra.mxu0 0.0
        %400 = vmatprep.mubr.f32.mxu0 0.0
        %401 = vmatmul.mubr.f32.gmra.mxu0 %v330
        %v402 = vpop.f32.mrf.mxu0
        %v403 = vadd.f32 0.0, %v402
        %v404 = vpop.f32.mrf.mxu0
        %v405 = vadd.f32 0.0, %v404
        %406 = vdwg.mxu0
        %v407 = vadd.f32 %v318, %v403
        %v408 = vadd.f32 %v325, %v405
        %410 = vset.pattern.permute.xlu0 0
        %411 = vperm.xlu0 %410, %v280
        %v412 = vpop.permute.xlu0 %411
        %v414 = vmul.f32 %v412, %v407
        %v415 = vmul.f32 %v412, %v408
        %v416 = vstv %s282
        %v417 = vmul.f32 %v416, %v414
        %v418 = vmul.f32 %v416, %v415
        %v421 = vcombine.low %v417, %v418
        %v423 = vadd.f32 %v283, %v421
        %424 = vst [vmem:[%s134] sm:$0xff] %v423
        %s425 = sand.u32 %s54, 1
        %s426 = scalar_lea.sflag [#allocation8], %s425
        %s427 = sand.u32 %s54, 1
        %s428 = smul.addr %s427, 8
        %s429 = scalar_lea.vmem [#allocation9], %s428
        // Predicated region
        $region29: #{tpu_custom_call.1} parent=23 // pred_check
          %p430 = pneg %p64
        $region30: #{tpu_custom_call.1} parent=23 // pred_check_branch
          %432 = sbr.rel (%p430) target = $region32
        $region31: #{tpu_custom_call.1} parent=23 // pred_region
          %s434 = ssub.s32 128, 128
          %435 = vsyncadd %s426, %s434
          %s436 = smul.addr %s20, 2
          %s437 = smul.addr %s436, 64
          %s438 = scalar_lea.hbm %s2, %s437
          %s440 = sshll.u32 %s429, 4
          %s441 = int_to_ptr.vmem [resolvable:$true] %s440
          %443 = dma.vmem_to_hbm [thread:$0]  %s441, 128, %s438, %s426
        $region32: #{tpu_custom_call.1} parent=23 // pred_fallthru
          _
      $region24: #{tpu_custom_call.1} parent=5 // pred_fallthru
        _
      %p444 = scmp.le.s32.totalorder 2, %s15
      // Predicated region
      $region33: #{tpu_custom_call.1} parent=5 // pred_check
        %p445 = pneg %p444
      $region34: #{tpu_custom_call.1} parent=5 // pred_check_branch
        %447 = sbr.rel (%p445) target = $region36
      $region35: #{tpu_custom_call.1} parent=5 // pred_region
        %s448 = ssub.s32 %s15, 2
        // Predicated region
        $region37: #{tpu_custom_call.1} parent=35 // pred_check
          %p449 = pneg %p70
        $region38: #{tpu_custom_call.1} parent=35 // pred_check_branch
          %451 = sbr.rel (%p449) target = $region40
        $region39: #{tpu_custom_call.1} parent=35 // pred_region
          %s452 = sand.u32 %s55, 1
          %s453 = scalar_lea.sflag [#allocation8], %s452
          %s454 = sand.u32 %s55, 1
          %s455 = smul.addr %s454, 8
          %s456 = scalar_lea.vmem [#allocation9], %s455
          %457 = dma.done %s453, 128
        $region40: #{tpu_custom_call.1} parent=35 // pred_fallthru
          _
      $region36: #{tpu_custom_call.1} parent=5 // pred_fallthru
        _
    $region6: #{tpu_custom_call.1} parent=1 // loop_footer
      %s19 = sadd.s32 1, %s15
    $region7: #{tpu_custom_call.1} parent=1 // loop_footer_branch
      %14 = sbr.rel target = $region3
    $region8: #{tpu_custom_call.1} parent=1 // loop_exit
      _
    %458 = vsyncpa [#allocation7], 1
    %s459 = scalar_lea.sflag [#allocation7], 1
    %460 = vsyncpa %s459, 1
    %461 = vsyncpa [#allocation8], 1
    %s462 = scalar_lea.sflag [#allocation8], 1
    %463 = vsyncpa %s462, 1

</llo_original>
